<compile_context>
chip_gen: v7x
topology: tpu7x:2x2x1
jax: 0.10.0
libtpu: 0.0.40
codegen_flags: <defaults>
</compile_context>

<pallas_src>
import jax
import jax.numpy as jnp
from jax.experimental import pallas as pl
from jax.experimental.pallas import tpu as pltpu


def mlp_kernel(x_ref, params_ref, o_ref):
    # x_ref:      (1, TB)  -- TB batch points along the lane axis (lane-dense)
    # params_ref: (H, 4)   -- col 0 = w1, col 1 = b1, col 2 = w2, col 3 row 0 = b2
    # o_ref:      (1, TB)
    x = x_ref[...]                        # (1, TB)
    w1 = params_ref[:, 0:1]               # (H, 1)
    b1 = params_ref[:, 1:2]               # (H, 1)
    w2 = params_ref[:, 2:3]               # (H, 1)
    b2 = params_ref[0:1, 3:4]             # (1, 1)

    # hidden = relu(w1 * x + b1)  -- K == 1, so this is pure VPU broadcast work.
    h = jnp.maximum(w1 * x + b1, 0.0)                      # (H, TB)
    # output = sum_j w2[j] * h[j, :] + b2  -- N == 1, XLU sublane reduce, no MXU.
    out = jnp.sum(w2 * h, axis=0, keepdims=True) + b2      # (1, TB)
    o_ref[...] = out


def net_forward(x, w1, b1, w2, b2, *, tb=256):
    """Forward pass of Net: relu(x @ w1 + b1) @ w2 + b2.

    x: (B, 1); w1: (1, H); b1: (1, H); w2: (H, 1); b2: (1, 1)
    (w1/w2 are the transposed PyTorch Linear weights so y = x @ W + b.)
    """
    B, n_input = x.shape
    n_hidden = w1.shape[1]
    n_output = w2.shape[1]
    # TODO(synk): general n_input/n_output > 1 would need real MXU matmuls; the
    # optimizer-comparison script only ever builds Net(1, H, 1).
    assert n_input == 1 and n_output == 1, "kernel specialized for Net(1, H, 1)"

    dtype = x.dtype
    # Pack all parameters into one small VMEM block: (H, 4).
    b2_col = jnp.zeros((n_hidden,), dtype).at[0].set(b2[0, 0])
    params = jnp.stack([w1[0, :], b1[0, :], w2[:, 0], b2_col], axis=1)   # (H, 4)

    # Batch goes on the lane axis; pad to a multiple of the lane tile.
    b_pad = pl.cdiv(B, tb) * tb
    xt = jnp.zeros((1, b_pad), dtype).at[0, :B].set(x[:, 0])

    out = pl.pallas_call(
        mlp_kernel,
        out_shape=jax.ShapeDtypeStruct((1, b_pad), dtype),
        grid=(b_pad // tb,),
        in_specs=[
            pl.BlockSpec((1, tb), lambda i: (0, i)),         # x tile, lane-dense
            pl.BlockSpec((n_hidden, 4), lambda i: (0, 0)),   # packed params (resident)
        ],
        out_specs=pl.BlockSpec((1, tb), lambda i: (0, i)),   # lane-dense output stores
        compiler_params=pltpu.CompilerParams(
            dimension_semantics=("parallel",)),              # megacore split on v7x
    )(xt, params)
    return out[0, :B].reshape(B, n_output)


def _ref_forward(x, w1, b1, w2, b2):
    h = jnp.maximum(x @ w1 + b1, 0.0)
    return h @ w2 + b2


if __name__ == "__main__":
    # Net(n_input=1, n_hidden=32, n_output=1) on 500 points in [-1, 1]
    # (matches x = torch.unsqueeze(torch.linspace(-1, 1, 500), dim=1)).
    n_input, n_hidden, n_output = 1, 32, 1
    batch = 500

    key = jax.random.PRNGKey(0)
    k1, k2, k3, k4 = jax.random.split(key, 4)

    x = jnp.linspace(-1.0, 1.0, batch, dtype=jnp.float32).reshape(batch, n_input)

    # PyTorch-style init: U(-1/sqrt(fan_in), 1/sqrt(fan_in))
    bound1 = 1.0 / (n_input ** 0.5)
    w1 = jax.random.uniform(k1, (n_input, n_hidden), jnp.float32, -bound1, bound1)
    b1 = jax.random.uniform(k2, (1, n_hidden), jnp.float32, -bound1, bound1)
    bound2 = 1.0 / (n_hidden ** 0.5)
    w2 = jax.random.uniform(k3, (n_hidden, n_output), jnp.float32, -bound2, bound2)
    b2 = jax.random.uniform(k4, (1, n_output), jnp.float32, -bound2, bound2)

    out = jax.block_until_ready(net_forward(x, w1, b1, w2, b2))
    ref = _ref_forward(x, w1, b1, w2, b2)

    assert out.shape == (batch, n_output)
    assert jnp.allclose(out, ref, atol=1e-5, rtol=1e-5), float(jnp.max(jnp.abs(out - ref)))

    print("KERNEL_OK")
</pallas_src>

<mosaic_0001>
module attributes {stable_mosaic.version = 11 : i64} {
  func.func @mlp_kernel(%arg0: i32, %arg1: memref<1x256xf32, #tpu.memory_space<vmem>>, %arg2: memref<32x4xf32, #tpu.memory_space<vmem>>, %arg3: memref<1x256xf32, #tpu.memory_space<vmem>>) attributes {dimension_semantics = [#tpu.dimension_semantics<parallel>], iteration_bounds = array<i64: 2>, scalar_prefetch = 0 : i64, scratch_operands = 0 : i64, tpu.core_type = #tpu.core_type<tc>, window_params = [{transform_indices = @transform_0, window_bounds = array<i64: 1, 256>}, {pipeline_mode = #tpu.pipeline_mode<synchronous>, transform_indices = @transform_1, window_bounds = array<i64: 32, 4>}, {transform_indices = @transform_2, window_bounds = array<i64: 1, 256>}]} {
    %c0 = arith.constant 0 : index
    %c0_0 = arith.constant 0 : index
    %0 = vector.load %arg1[%c0, %c0_0] : memref<1x256xf32, #tpu.memory_space<vmem>>, vector<1x256xf32>
    %c0_1 = arith.constant 0 : index
    %c0_2 = arith.constant 0 : index
    %1 = vector.load %arg2[%c0_1, %c0_2] : memref<32x4xf32, #tpu.memory_space<vmem>>, vector<32x1xf32>
    %c0_3 = arith.constant 0 : index
    %c1 = arith.constant 1 : index
    %2 = vector.load %arg2[%c0_3, %c1] : memref<32x4xf32, #tpu.memory_space<vmem>>, vector<32x1xf32>
    %c0_4 = arith.constant 0 : index
    %c2 = arith.constant 2 : index
    %3 = vector.load %arg2[%c0_4, %c2] : memref<32x4xf32, #tpu.memory_space<vmem>>, vector<32x1xf32>
    %c0_5 = arith.constant 0 : index
    %c3 = arith.constant 3 : index
    %4 = vector.load %arg2[%c0_5, %c3] : memref<32x4xf32, #tpu.memory_space<vmem>>, vector<1x1xf32>
    %5 = vector.broadcast %1 : vector<32x1xf32> to vector<32x256xf32>
    %6 = vector.broadcast %0 : vector<1x256xf32> to vector<32x256xf32>
    %7 = arith.mulf %5, %6 : vector<32x256xf32>
    %8 = vector.broadcast %2 : vector<32x1xf32> to vector<32x256xf32>
    %9 = arith.addf %7, %8 : vector<32x256xf32>
    %cst = arith.constant 0.000000e+00 : f32
    %10 = vector.broadcast %cst : f32 to vector<32x256xf32>
    %11 = arith.maximumf %9, %10 : vector<32x256xf32>
    %12 = vector.broadcast %3 : vector<32x1xf32> to vector<32x256xf32>
    %13 = arith.mulf %12, %11 : vector<32x256xf32>
    %cst_6 = arith.constant dense<0.000000e+00> : vector<256xf32>
    %14 = vector.multi_reduction <add>, %13, %cst_6 [0] : vector<32x256xf32> to vector<256xf32>
    %15 = vector.shape_cast %14 : vector<256xf32> to vector<1x256xf32>
    %16 = vector.broadcast %4 : vector<1x1xf32> to vector<1x256xf32>
    %17 = arith.addf %15, %16 : vector<1x256xf32>
    %c0_7 = arith.constant 0 : index
    %c0_8 = arith.constant 0 : index
    %18 = vector.load %arg3[%c0_7, %c0_8] : memref<1x256xf32, #tpu.memory_space<vmem>>, vector<1x256xf32>
    tpu.vector_store %arg3[%c0_7, %c0_8], %17 {strides = array<i32>} : memref<1x256xf32, #tpu.memory_space<vmem>>, vector<1x256xf32>,
    return
  }
  func.func @transform_0(%arg0: i32) -> (i32, i32) {
    %c0_i32 = arith.constant 0 : i32
    %c0_i32_0 = arith.constant 0 : i32
    return %c0_i32, %arg0 : i32, i32
  }
  func.func @transform_1(%arg0: i32) -> (i32, i32) {
    %c0_i32 = arith.constant 0 : i32
    %c0_i32_0 = arith.constant 0 : i32
    %c0_i32_1 = arith.constant 0 : i32
    return %c0_i32, %c0_i32_0 : i32, i32
  }
  func.func @transform_2(%arg0: i32) -> (i32, i32) {
    %c0_i32 = arith.constant 0 : i32
    %c0_i32_0 = arith.constant 0 : i32
    return %c0_i32, %arg0 : i32, i32
  }
}

</mosaic_0001>

<llo_original>
// kernel: tpu_custom_call.1
$region0: #{tpu_custom_call.1}
  #allocation0 [shape = 'u32[]', space=smem, size = 0x4, offset = 0x4, fixed_abs, tag = 'smem constant byte address 0x4 - core index']
  #allocation1 [shape = 'u32[144,128]{1,0:T(1,128)}', space=vmem, size = 0x12000, scoped, tag = 'internal scratch']
  %s0 = inlined_call_operand.vmem [shape: f32[1,512], index: 0, kind: input, shape index: {}]
  %s1 = inlined_call_operand.vmem [shape: f32[32,4], index: 1, kind: input, shape index: {}]
  %s2 = inlined_call_operand.hbm [shape: f32[1,512], index: 2, kind: output, shape index: {}]
  %s3 = sld [smem:[#allocation0]]
  $region41: #{tpu_custom_call.1} parent=0
    _
  %s5 = ssub.s32 1, %s3
  %s6 = scalar_select 0, %s5, %s3
  $region1: #{tpu_custom_call.1} parent=0
    #allocation2 [shape = 'u8[2048]{0}', space=vmem, size = 0x800, scoped, tag = 'output window, operand 0']
    #allocation3 [shape = 's32[2]{0}', space=sflag, size = 0x8, scoped, tag = 'scoped memory for tpu_custom_call.1']
    %7 = vsyncpa [#allocation3], 0
    %s8 = scalar_lea.sflag [#allocation3], 1
    %9 = vsyncpa %s8, 0
    loop: start=0, step=1, limit=4
    $region2: #{tpu_custom_call.1} parent=1 // loop_pre_header
      _
    $region3: #{tpu_custom_call.1} parent=1 // loop_header
      %s11 = sphi 0, %s15
      %p12 = scmp.ge.s32.totalorder %s11, 4
      %s21 = sphi 0, %s23
      %s24 = sphi 0, %s21
      %s25 = sphi 0, %s24
      %s41 = sphi 0, %s25
      %s45 = sphi 0, %s45
      %s47 = sphi 0, %s45
      %s48 = sphi 0, %s47
      %s62 = sphi 0, %s48
      %s68 = sphi 0, %s70
      %s71 = sphi 0, %s68
      %s72 = sphi 0, %s71
      %s88 = sphi 0, %s72
    $region4: #{tpu_custom_call.1} parent=1 // loop_header_branch
      %14 = sbr.rel (%p12) target = $region8
    $region5: #{tpu_custom_call.1} parent=1 // loop_body
      %s16 = ssub.s32 %s11, 1
      %s17 = ssub.s32 %s11, 2
      %s18 = sadd.s32 %s11, 1
      %s19 = ssub.s32 %s11, %s18
      %p20 = scmp.eq.s32.totalorder %s19, 0
      %s22 = sadd.s32 %s21, 1
      %s23 = scalar_select %p20, %s21, %s22
      %p26 = pneg %p20
      %p27 = scmp.eq.s32.totalorder %s11, 1
      %p28 = por %p26, %p27
      %p29 = scmp.ne.s32.totalorder %s21, %s24
      %p30 = scmp.eq.s32.totalorder %s11, 0
      %p31 = por %p29, %p30
      %p32 = scmp.ne.s32.totalorder %s21, %s24
      %p33 = scmp.eq.s32.totalorder %s16, 1
      %p34 = por %p32, %p33
      %p35 = scmp.ne.s32.totalorder %s24, %s25
      %p36 = scmp.eq.s32.totalorder %s16, 0
      %p37 = por %p35, %p36
      %p38 = scmp.ne.s32.totalorder %s24, %s25
      %p39 = scmp.eq.s32.totalorder %s17, 1
      %p40 = por %p38, %p39
      %p42 = scmp.ne.s32.totalorder %s25, %s41
      %p43 = scmp.eq.s32.totalorder %s17, 0
      %p44 = por %p42, %p43
      %s46 = sadd.s32 %s45, 1
      %p49 = scmp.eq.s32.totalorder %s11, 1
      %p50 = scmp.ne.s32.totalorder %s45, %s47
      %p51 = scmp.eq.s32.totalorder %s11, 0
      %p52 = por %p50, %p51
      %p53 = scmp.ne.s32.totalorder %s45, %s47
      %p54 = scmp.eq.s32.totalorder %s16, 1
      %p55 = por %p53, %p54
      %p56 = scmp.ne.s32.totalorder %s47, %s48
      %p57 = scmp.eq.s32.totalorder %s16, 0
      %p58 = por %p56, %p57
      %p59 = scmp.ne.s32.totalorder %s47, %s48
      %p60 = scmp.eq.s32.totalorder %s17, 1
      %p61 = por %p59, %p60
      %p63 = scmp.ne.s32.totalorder %s48, %s62
      %p64 = scmp.eq.s32.totalorder %s17, 0
      %p65 = por %p63, %p64
      %s66 = ssub.s32 %s11, %s18
      %p67 = scmp.eq.s32.totalorder %s66, 0
      %s69 = sadd.s32 %s68, 1
      %s70 = scalar_select %p67, %s68, %s69
      %p73 = pneg %p67
      %p74 = scmp.eq.s32.totalorder %s11, 1
      %p75 = por %p73, %p74
      %p76 = scmp.ne.s32.totalorder %s68, %s71
      %p77 = scmp.eq.s32.totalorder %s11, 0
      %p78 = por %p76, %p77
      %p79 = scmp.ne.s32.totalorder %s68, %s71
      %p80 = scmp.eq.s32.totalorder %s16, 1
      %p81 = por %p79, %p80
      %p82 = scmp.ne.s32.totalorder %s71, %s72
      %p83 = scmp.eq.s32.totalorder %s16, 0
      %p84 = por %p82, %p83
      %p85 = scmp.ne.s32.totalorder %s71, %s72
      %p86 = scmp.eq.s32.totalorder %s17, 1
      %p87 = por %p85, %p86
      %p89 = scmp.ne.s32.totalorder %s72, %s88
      %p90 = scmp.eq.s32.totalorder %s17, 0
      %p91 = por %p89, %p90
      %p92 = scmp.le.s32.totalorder 1, %s11
      %p93 = scmp.lt.s32.totalorder %s11, 3
      %p94 = pnand %p92, %p93
      %p95 = pneg %p94
      // Predicated region
      $region9: #{tpu_custom_call.1} parent=5 // pred_check
        _
      $region10: #{tpu_custom_call.1} parent=5 // pred_check_branch
        %97 = sbr.rel (%p94) target = $region12
      $region11: #{tpu_custom_call.1} parent=5 // pred_region
        %s98 = ssub.s32 %s11, 1
        // Predicated region
        $region13: #{tpu_custom_call.1} parent=11 // pred_check
          %p99 = pneg %p58
        $region14: #{tpu_custom_call.1} parent=11 // pred_check_branch
          %101 = sbr.rel (%p99) target = $region16
        $region15: #{tpu_custom_call.1} parent=11 // pred_region
          _
        $region16: #{tpu_custom_call.1} parent=11 // pred_fallthru
          _
      $region12: #{tpu_custom_call.1} parent=5 // pred_fallthru
        _
      %p102 = scmp.lt.s32.totalorder %s11, 2
      // Predicated region
      $region17: #{tpu_custom_call.1} parent=5 // pred_check
        %p103 = pneg %p102
      $region18: #{tpu_custom_call.1} parent=5 // pred_check_branch
        %105 = sbr.rel (%p103) target = $region20
      $region19: #{tpu_custom_call.1} parent=5 // pred_region
        // Predicated region
        $region21: #{tpu_custom_call.1} parent=19 // pred_check
          %p106 = pneg %p31
        $region22: #{tpu_custom_call.1} parent=19 // pred_check_branch
          %108 = sbr.rel (%p106) target = $region24
        $region23: #{tpu_custom_call.1} parent=19 // pred_region
          %s109 = smul.u32 2, %s11
          %p110 = scmp.lt.s32.totalorder %s109, 3
          %s111 = scalar_select %p110, %s109, 3
          %s112 = scalar_lea.vmem %s0, %s111
          %s113 = smul.u32 2, %s11
        $region24: #{tpu_custom_call.1} parent=19 // pred_fallthru
          _
      $region20: #{tpu_custom_call.1} parent=5 // pred_fallthru
        _
      %p114 = scmp.le.s32.totalorder 1, %s11
      %p115 = scmp.lt.s32.totalorder %s11, 3
      %p116 = pnand %p114, %p115
      %p117 = pneg %p116
      // Predicated region
      $region25: #{tpu_custom_call.1} parent=5 // pred_check
        _
      $region26: #{tpu_custom_call.1} parent=5 // pred_check_branch
        %119 = sbr.rel (%p116) target = $region28
      $region27: #{tpu_custom_call.1} parent=5 // pred_region
        %s120 = ssub.s32 %s11, 1
        %s121 = smul.u32 2, %s16
        %p122 = scmp.lt.s32.totalorder %s121, 3
        %s123 = scalar_select %p122, %s121, 3
        %s124 = scalar_lea.vmem %s0, %s123
        %p125 = pneg %p37
        %p126 = pneg %p34
        %p127 = pneg %p58
        %p128 = pneg %p55
        %p129 = pneg %p84
        %p130 = pneg %p81
        %s131 = sand.u32 %s71, 1
        %s132 = scalar_lea.sflag [#allocation3], %s131
        %s133 = sand.u32 %s71, 1
        %s134 = smul.addr %s133, 2
        %s135 = scalar_lea.vmem [#allocation2], %s134
        %s136 = smul.u32 2, %s16
        %p137 = scmp.lt.s32.totalorder %s136, 3
        %s138 = scalar_select %p137, %s136, 3
        %s139 = scalar_lea.vmem %s0, %s138
        %s140 = smul.u32 2, %s16
        %s141 = smul.u32 2, %s16
        %v142 = vld [vmem:[%s139] sm:$0x3]
        %v143 = vld [vmem:[%s1] sm:$0xff]
        %v144 = vld [vmem:[%s1 + $0x8] sm:$0xff]
        %v145 = vld [vmem:[%s1 + $0x10] sm:$0xff]
        %v146 = vld [vmem:[%s1 + $0x18] sm:$0xff]
        %v147 = vld [vmem:[%s1] sm:$0x1]
        %149 = vset.pattern.permute.xlu0 0
        %150 = vperm.xlu0 %149, %v143
        %v151 = vpop.permute.xlu0 %150
        %154 = vset.pattern.permute.xlu0 0
        %155 = vperm.xlu0 %154, %v144
        %v156 = vpop.permute.xlu0 %155
        %159 = vset.pattern.permute.xlu0 0
        %160 = vperm.xlu0 %159, %v145
        %v161 = vpop.permute.xlu0 %160
        %164 = vset.pattern.permute.xlu0 0
        %165 = vperm.xlu0 %164, %v146
        %v166 = vpop.permute.xlu0 %165
        %v169 = vlaneseq
        %v170 = vshrl.u32 %v169, 7
        %v171 = vsub.s32 0, %v170
        %v172 = vrot.slane %v142, %v171
        %v173 = vlaneseq
        %v174 = vshrl.u32 %v173, 7
        %v175 = vsub.s32 1, %v174
        %v176 = vrot.slane %v142, %v175
        %v179 = vmul.f32 %v151, %v172
        %v180 = vmul.f32 %v151, %v176
        %v181 = vmul.f32 %v156, %v172
        %v182 = vmul.f32 %v156, %v176
        %v183 = vmul.f32 %v161, %v172
        %v184 = vmul.f32 %v161, %v176
        %v185 = vmul.f32 %v166, %v172
        %v186 = vmul.f32 %v166, %v176
        %187 = vset.pattern.permute.xlu0 1
        %188 = vperm.xlu0 %187, %v143
        %v189 = vpop.permute.xlu0 %188
        %191 = vset.pattern.permute.xlu0 1
        %192 = vperm.xlu0 %191, %v144
        %v193 = vpop.permute.xlu0 %192
        %195 = vset.pattern.permute.xlu0 1
        %196 = vperm.xlu0 %195, %v145
        %v197 = vpop.permute.xlu0 %196
        %199 = vset.pattern.permute.xlu0 1
        %200 = vperm.xlu0 %199, %v146
        %v201 = vpop.permute.xlu0 %200
        %v203 = vadd.f32 %v179, %v189
        %v204 = vadd.f32 %v180, %v189
        %v205 = vadd.f32 %v181, %v193
        %v206 = vadd.f32 %v182, %v193
        %v207 = vadd.f32 %v183, %v197
        %v208 = vadd.f32 %v184, %v197
        %v209 = vadd.f32 %v185, %v201
        %v210 = vadd.f32 %v186, %v201
        %v211 = vmax.f32 %v203, 0.0
        %v212 = vmax.f32 %v204, 0.0
        %v213 = vmax.f32 %v205, 0.0
        %v214 = vmax.f32 %v206, 0.0
        %v215 = vmax.f32 %v207, 0.0
        %v216 = vmax.f32 %v208, 0.0
        %v217 = vmax.f32 %v209, 0.0
        %v218 = vmax.f32 %v210, 0.0
        %219 = vset.pattern.permute.xlu0 2
        %220 = vperm.xlu0 %219, %v143
        %v221 = vpop.permute.xlu0 %220
        %223 = vset.pattern.permute.xlu0 2
        %224 = vperm.xlu0 %223, %v144
        %v225 = vpop.permute.xlu0 %224
        %227 = vset.pattern.permute.xlu0 2
        %228 = vperm.xlu0 %227, %v145
        %v229 = vpop.permute.xlu0 %228
        %231 = vset.pattern.permute.xlu0 2
        %232 = vperm.xlu0 %231, %v146
        %v233 = vpop.permute.xlu0 %232
        %v235 = vmul.f32 %v221, %v211
        %v236 = vmul.f32 %v221, %v212
        %v237 = vmul.f32 %v225, %v213
        %v238 = vmul.f32 %v225, %v214
        %v239 = vmul.f32 %v229, %v215
        %v240 = vmul.f32 %v229, %v216
        %v241 = vmul.f32 %v233, %v217
        %v242 = vmul.f32 %v233, %v218
        %v243 = vadd.f32 %v235, %v237
        %v244 = vadd.f32 %v243, %v239
        %v245 = vadd.f32 %v244, %v241
        %v246 = vrot.slane %v245, 4
        %v247 = vadd.f32 %v245, %v246
        %v248 = vrot.slane %v247, 2
        %v249 = vadd.f32 %v247, %v248
        %v250 = vrot.slane %v249, 1
        %v251 = vadd.f32 %v249, %v250
        %v252 = vadd.f32 %v236, %v238
        %v253 = vadd.f32 %v252, %v240
        %v254 = vadd.f32 %v253, %v242
        %v255 = vrot.slane %v254, 4
        %v256 = vadd.f32 %v254, %v255
        %v257 = vrot.slane %v256, 2
        %v258 = vadd.f32 %v256, %v257
        %v259 = vrot.slane %v258, 1
        %v260 = vadd.f32 %v258, %v259
        %262 = vset.pattern.permute.xlu0 3
        %263 = vperm.xlu0 %262, %v147
        %v264 = vpop.permute.xlu0 %263
        %v266 = vadd.f32 %v251, %v264
        %v267 = vadd.f32 %v260, %v264
        %v270 = vcombine.low %v266, %v267
        %v272 = vunpack.c.l.s4 1966171168
        %v273 = vunpack.c.0.s8 %v272
        %v274 = vlaneseq
        %v275 = vshrl.u32 %v274, 7
        %v276 = vsub.s32 %v273, %v275
        %v277 = vrot.slane %v270, %v276
        %v279 = vunpack.c.l.s4 1966171168
        %v280 = vunpack.c.0.s8 %v279
        %v281 = vlaneseq
        %v282 = vshrl.u32 %v281, 7
        %v283 = vsub.s32 %v280, %v282
        %v284 = vrot.slane %v277, %v283
        %v286 = vlaneseq
        %vm287 = vcmp.ge.s32.totalorder %v286, 0
        %vm288 = vcmp.lt.s32.totalorder %v286, 256
        %vm289 = vmand %vm287, %vm288
        %290 = vst.msk [vmem:[%s135] sm:$0x3] %vm289, %v284
        %s291 = sand.u32 %s71, 1
        %s292 = scalar_lea.sflag [#allocation3], %s291
        %s293 = sand.u32 %s71, 1
        %s294 = smul.addr %s293, 2
        %s295 = scalar_lea.vmem [#allocation2], %s294
        // Predicated region
        $region29: #{tpu_custom_call.1} parent=27 // pred_check
          %p296 = pneg %p81
        $region30: #{tpu_custom_call.1} parent=27 // pred_check_branch
          %298 = sbr.rel (%p296) target = $region32
        $region31: #{tpu_custom_call.1} parent=27 // pred_region
          %s299 = smul.u32 2, %s16
          %s301 = ssub.s32 32, 32
          %302 = vsyncadd %s292, %s301
          %s303 = smul.addr %s299, 16
          %s304 = scalar_lea.hbm %s2, %s303
          %s306 = sshll.u32 %s295, 4
          %s307 = int_to_ptr.vmem [resolvable:$true] %s306
          %309 = dma.vmem_to_hbm [thread:$0]  %s307, 32, %s304, %s292
        $region32: #{tpu_custom_call.1} parent=27 // pred_fallthru
          _
      $region28: #{tpu_custom_call.1} parent=5 // pred_fallthru
        _
      %p310 = scmp.le.s32.totalorder 2, %s11
      // Predicated region
      $region33: #{tpu_custom_call.1} parent=5 // pred_check
        %p311 = pneg %p310
      $region34: #{tpu_custom_call.1} parent=5 // pred_check_branch
        %313 = sbr.rel (%p311) target = $region36
      $region35: #{tpu_custom_call.1} parent=5 // pred_region
        %s314 = ssub.s32 %s11, 2
        // Predicated region
        $region37: #{tpu_custom_call.1} parent=35 // pred_check
          %p315 = pneg %p87
        $region38: #{tpu_custom_call.1} parent=35 // pred_check_branch
          %317 = sbr.rel (%p315) target = $region40
        $region39: #{tpu_custom_call.1} parent=35 // pred_region
          %s318 = sand.u32 %s72, 1
          %s319 = scalar_lea.sflag [#allocation3], %s318
          %s320 = sand.u32 %s72, 1
          %s321 = smul.addr %s320, 2
          %s322 = scalar_lea.vmem [#allocation2], %s321
          %323 = dma.done %s319, 32
        $region40: #{tpu_custom_call.1} parent=35 // pred_fallthru
          _
      $region36: #{tpu_custom_call.1} parent=5 // pred_fallthru
        _
    $region6: #{tpu_custom_call.1} parent=1 // loop_footer
      %s15 = sadd.s32 1, %s11
    $region7: #{tpu_custom_call.1} parent=1 // loop_footer_branch
      %10 = sbr.rel target = $region3
    $region8: #{tpu_custom_call.1} parent=1 // loop_exit
      _
    %324 = vsyncpa [#allocation3], 1
    %s325 = scalar_lea.sflag [#allocation3], 1
    %326 = vsyncpa %s325, 1

</llo_original>
